<compile_context>
chip_gen: v6e
topology: v6e:2x2x1
jax: 0.10.0
libtpu: 0.0.40
codegen_flags: <defaults>
</compile_context>

<pallas_src>
import functools

import jax
import jax.numpy as jnp
from jax import lax
from jax.experimental import pallas as pl
from jax.experimental.pallas import tpu as pltpu

# HungarianMatcher-style cost weights (class prob + box L1).
COST_CLASS = 1.0
COST_BBOX = 5.0


def _set_loss_kernel(num_classes, n_tgt, eos_coef,
                     tl_ref, logits_ref, pb_ref, tb_ref, out_ref):
    b = pl.program_id(0)
    Q, Cp1 = logits_ref.shape[1], logits_ref.shape[2]

    x = logits_ref[0].astype(jnp.float32)             # (Q, C+1)
    pb = pb_ref[0].astype(jnp.float32)                # (Q, 4)
    tb = tb_ref[0].astype(jnp.float32)                # (N, 4)

    # --- softmax over classes (shared by matcher cost and cross-entropy) ---
    m = jnp.max(x, axis=-1, keepdims=True)            # (Q, 1)
    e = jnp.exp(x - m)
    sum_e = jnp.sum(e, axis=-1, keepdims=True)        # (Q, 1)
    prob = e * pl.reciprocal(sum_e)                   # (Q, C+1), exact reciprocal
    lse = m + jnp.log(sum_e)                          # (Q, 1)

    cls_iota = lax.broadcasted_iota(jnp.int32, (Q, Cp1), 1)
    row_iota_f = lax.broadcasted_iota(jnp.int32, (Q, 1), 0).astype(jnp.float32)

    # Target one-hot per query, initialized to the no-object class everywhere.
    tgt_onehot = (cls_iota == num_classes).astype(jnp.float32)   # (Q, C+1)
    used = jnp.zeros((Q, 1), dtype=jnp.bool_)
    bbox_sum = jnp.float32(0.0)

    # TODO(synk): greedy column-wise assignment on class+L1 cost; the reference
    # HungarianMatcher uses exact linear_sum_assignment plus a GIoU cost term.
    for j in range(n_tgt):                            # static, small (N): trace-time unroll
        lab_j = tl_ref[b, j]                          # SMEM scalar read
        onehot_lab = (cls_iota == lab_j)              # (Q, C+1) bool
        # class cost column: -prob[:, lab_j]
        p_j = jnp.sum(jnp.where(onehot_lab, prob, 0.0), axis=-1, keepdims=True)   # (Q,1)
        # L1 box cost column (also the matched-pair L1 loss contribution)
        l1_j = jnp.sum(jnp.abs(pb - tb[j:j + 1, :]), axis=-1, keepdims=True)      # (Q,1)
        cost_j = COST_BBOX * l1_j - COST_CLASS * p_j
        masked = jnp.where(used, jnp.float32(1e30), cost_j)
        min_val = jnp.min(masked)
        # first query attaining the minimum (XLU reduces; no cross-lane gather)
        q_j = jnp.min(jnp.where(masked <= min_val, row_iota_f, jnp.float32(Q)))
        row_mask = (row_iota_f == q_j)                # (Q,1) one-hot of matched query
        used = jnp.logical_or(used, row_mask)
        tgt_onehot = jnp.where(row_mask, onehot_lab.astype(jnp.float32), tgt_onehot)
        bbox_sum = bbox_sum + jnp.sum(jnp.where(row_mask, l1_j, 0.0))

    # --- weighted cross-entropy (F.cross_entropy with empty_weight, 'mean') ---
    matched = 1.0 - tgt_onehot[:, num_classes:num_classes + 1]     # (Q,1) 1 if real class
    picked = jnp.sum(tgt_onehot * x, axis=-1, keepdims=True)       # (Q,1) logit of target
    nll = lse - picked
    w_q = eos_coef + (1.0 - eos_coef) * matched                    # empty_weight[target_class]
    ce_num = jnp.sum(w_q * nll)
    ce_den = jnp.sum(w_q)

    # --- cardinality error: #(argmax != no-object) vs number of targets ---
    # first index attaining the row max == torch.argmax tie-break
    amax_idx = jnp.min(jnp.where(x >= m, cls_iota, Cp1), axis=-1, keepdims=True)
    card_pred = jnp.sum((amax_idx != num_classes).astype(jnp.float32))
    card_err = jnp.abs(card_pred - jnp.float32(n_tgt))

    # Lane-dense partials: [ce_num, ce_den, card_err, bbox_sum, 0 ...]
    lane = lax.broadcasted_iota(jnp.int32, (1, 128), 1)
    out_ref[0] = (jnp.where(lane == 0, ce_num, 0.0)
                  + jnp.where(lane == 1, ce_den, 0.0)
                  + jnp.where(lane == 2, card_err, 0.0)
                  + jnp.where(lane == 3, bbox_sum, 0.0))


def set_criterion_forward(pred_logits, pred_boxes, tgt_labels, tgt_boxes,
                          eos_coef=0.1, aux_weight=1.0):
    B, Q, Cp1 = pred_logits.shape
    num_classes = Cp1 - 1
    N = tgt_labels.shape[1]

    kernel = functools.partial(_set_loss_kernel, num_classes, N, float(eos_coef))
    partials = pl.pallas_call(
        kernel,
        out_shape=jax.ShapeDtypeStruct((B, 1, 128), jnp.float32),
        grid_spec=pltpu.PrefetchScalarGridSpec(
            num_scalar_prefetch=1,                    # tgt_labels -> SMEM
            grid=(B,),
            in_specs=[
                pl.BlockSpec((1, Q, Cp1), lambda b, tl: (b, 0, 0)),
                pl.BlockSpec((1, Q, 4), lambda b, tl: (b, 0, 0)),
                pl.BlockSpec((1, N, 4), lambda b, tl: (b, 0, 0)),
            ],
            out_specs=pl.BlockSpec((1, 1, 128), lambda b, tl: (b, 0, 0)),
        ),
        compiler_params=pltpu.CompilerParams(dimension_semantics=("parallel",)),
    )(tgt_labels.astype(jnp.int32), pred_logits, pred_boxes, tgt_boxes)

    sums = jnp.sum(partials[:, 0, :4], axis=0)        # reduce per-batch partials
    ce_num, ce_den, card_sum, bbox_sum = sums[0], sums[1], sums[2], sums[3]

    # TODO(synk): num_boxes assumes all N targets per image are real (no padding) and
    # world_size == 1; the reference sums true per-image counts and all-reduces.
    num_boxes = jnp.maximum(jnp.float32(B * N), 1.0)

    losses = {
        'loss_ce': ce_num / ce_den,                   # weighted-mean CE over all B*Q queries
        'cardinality_error': card_sum / jnp.float32(B),
        'loss_bbox': bbox_sum / num_boxes,
    }
    # TODO(synk): 'aux_outputs' branch (aux_weight accumulation) and any 'loss_giou'
    # term are omitted: no aux heads in the synthetic inputs, and the exact-Hungarian
    # + GIoU matcher cost has no clean in-kernel equivalent here.
    return losses


if __name__ == "__main__":
    key = jax.random.PRNGKey(0)
    B, Q, num_classes, N = 2, 16, 7, 4
    Cp1 = num_classes + 1
    k1, k2, k3, k4 = jax.random.split(key, 4)

    pred_logits = jax.random.normal(k1, (B, Q, Cp1), jnp.float32)
    pred_boxes = jax.nn.sigmoid(jax.random.normal(k2, (B, Q, 4), jnp.float32))
    tgt_labels = jax.random.randint(k3, (B, N), 0, num_classes).astype(jnp.int32)
    tgt_boxes = jax.nn.sigmoid(jax.random.normal(k4, (B, N, 4), jnp.float32))

    losses = jax.jit(set_criterion_forward)(pred_logits, pred_boxes, tgt_labels, tgt_boxes)
    losses = jax.tree_util.tree_map(jax.block_until_ready, losses)
    assert all(jnp.isfinite(v) for v in losses.values())
    print("KERNEL_OK")
</pallas_src>

<mosaic_0001>
module attributes {stable_mosaic.version = 11 : i64} {
  func.func @_set_loss_kernel(%arg0: i32, %arg1: memref<2x4xi32, #tpu.memory_space<smem>>, %arg2: memref<1x16x8xf32, #tpu.memory_space<vmem>>, %arg3: memref<1x16x4xf32, #tpu.memory_space<vmem>>, %arg4: memref<1x4x4xf32, #tpu.memory_space<vmem>>, %arg5: memref<1x1x128xf32, #tpu.memory_space<vmem>>) attributes {dimension_semantics = [#tpu.dimension_semantics<parallel>], iteration_bounds = array<i64: 2>, scalar_prefetch = 1 : i64, scratch_operands = 0 : i64, tpu.core_type = #tpu.core_type<tc>, window_params = [{transform_indices = @transform_0, window_bounds = array<i64: 1, 16, 8>}, {transform_indices = @transform_1, window_bounds = array<i64: 1, 16, 4>}, {transform_indices = @transform_2, window_bounds = array<i64: 1, 4, 4>}, {transform_indices = @transform_3, window_bounds = array<i64: 1, 1, 128>}]} {
    %c0 = arith.constant 0 : index
    %c0_0 = arith.constant 0 : index
    %c0_1 = arith.constant 0 : index
    %0 = vector.load %arg2[%c0, %c0_0, %c0_1] : memref<1x16x8xf32, #tpu.memory_space<vmem>>, vector<1x16x8xf32>
    %1 = vector.shape_cast %0 : vector<1x16x8xf32> to vector<16x8xf32>
    %c0_2 = arith.constant 0 : index
    %c0_3 = arith.constant 0 : index
    %c0_4 = arith.constant 0 : index
    %2 = vector.load %arg3[%c0_2, %c0_3, %c0_4] : memref<1x16x4xf32, #tpu.memory_space<vmem>>, vector<1x16x4xf32>
    %3 = vector.shape_cast %2 : vector<1x16x4xf32> to vector<16x4xf32>
    %c0_5 = arith.constant 0 : index
    %c0_6 = arith.constant 0 : index
    %c0_7 = arith.constant 0 : index
    %4 = vector.load %arg4[%c0_5, %c0_6, %c0_7] : memref<1x4x4xf32, #tpu.memory_space<vmem>>, vector<1x4x4xf32>
    %5 = vector.shape_cast %4 : vector<1x4x4xf32> to vector<4x4xf32>
    %cst = arith.constant dense<0xFF800000> : vector<16xf32>
    %6 = vector.multi_reduction <maximumf>, %1, %cst [1] : vector<16x8xf32> to vector<16xf32>
    %7 = vector.shape_cast %6 : vector<16xf32> to vector<16x1xf32>
    %8 = vector.broadcast %7 : vector<16x1xf32> to vector<16x8xf32>
    %9 = arith.subf %1, %8 : vector<16x8xf32>
    %10 = math.exp %9 : vector<16x8xf32>
    %cst_8 = arith.constant dense<0.000000e+00> : vector<16xf32>
    %11 = vector.multi_reduction <add>, %10, %cst_8 [1] : vector<16x8xf32> to vector<16xf32>
    %12 = vector.shape_cast %11 : vector<16xf32> to vector<16x1xf32>
    %13 = tpu.reciprocal %12 : vector<16x1xf32> -> vector<16x1xf32>
    %14 = vector.broadcast %13 : vector<16x1xf32> to vector<16x8xf32>
    %15 = arith.mulf %10, %14 : vector<16x8xf32>
    %16 = math.log %12 : vector<16x1xf32>
    %17 = arith.addf %7, %16 : vector<16x1xf32>
    %18 = tpu.iota {dimensions = array<i32: 1>} : vector<16x8xi32>
    %19 = tpu.iota {dimensions = array<i32: 0>} : vector<16x1xi32>
    %20 = arith.sitofp %19 : vector<16x1xi32> to vector<16x1xf32>
    %c7_i32 = arith.constant 7 : i32
    %21 = vector.broadcast %c7_i32 : i32 to vector<16x8xi32>
    %22 = arith.cmpi eq, %18, %21 : vector<16x8xi32>
    %23 = arith.extui %22 : vector<16x8xi1> to vector<16x8xi32>
    %24 = arith.sitofp %23 : vector<16x8xi32> to vector<16x8xf32>
    %false = arith.constant false
    %25 = vector.broadcast %false : i1 to vector<16x1xi1>
    %26 = arith.index_cast %arg0 : i32 to index
    %c0_9 = arith.constant 0 : index
    %27 = memref.load %arg1[%26, %c0_9] : memref<2x4xi32, #tpu.memory_space<smem>>
    %28 = vector.broadcast %27 : i32 to vector<16x8xi32>
    %29 = arith.cmpi eq, %18, %28 : vector<16x8xi32>
    %cst_10 = arith.constant 0.000000e+00 : f32
    %30 = vector.broadcast %cst_10 : f32 to vector<16x8xf32>
    %31 = arith.select %29, %15, %30 : vector<16x8xi1>, vector<16x8xf32>
    %cst_11 = arith.constant dense<0.000000e+00> : vector<16xf32>
    %32 = vector.multi_reduction <add>, %31, %cst_11 [1] : vector<16x8xf32> to vector<16xf32>
    %33 = vector.shape_cast %32 : vector<16xf32> to vector<16x1xf32>
    %34 = vector.extract_strided_slice %5 {offsets = [0, 0], sizes = [1, 4], strides = [1, 1]} : vector<4x4xf32> to vector<1x4xf32>
    %35 = vector.broadcast %34 : vector<1x4xf32> to vector<16x4xf32>
    %36 = arith.subf %3, %35 : vector<16x4xf32>
    %37 = math.absf %36 : vector<16x4xf32>
    %cst_12 = arith.constant dense<0.000000e+00> : vector<16xf32>
    %38 = vector.multi_reduction <add>, %37, %cst_12 [1] : vector<16x4xf32> to vector<16xf32>
    %39 = vector.shape_cast %38 : vector<16xf32> to vector<16x1xf32>
    %cst_13 = arith.constant 5.000000e+00 : f32
    %40 = vector.broadcast %cst_13 : f32 to vector<16x1xf32>
    %41 = arith.mulf %40, %39 : vector<16x1xf32>
    %cst_14 = arith.constant 1.000000e+00 : f32
    %42 = vector.broadcast %cst_14 : f32 to vector<16x1xf32>
    %43 = arith.mulf %42, %33 : vector<16x1xf32>
    %44 = arith.subf %41, %43 : vector<16x1xf32>
    %cst_15 = arith.constant 1.000000e+30 : f32
    %45 = vector.broadcast %cst_15 : f32 to vector<16x1xf32>
    %46 = arith.select %25, %45, %44 : vector<16x1xi1>, vector<16x1xf32>
    %47 = vector.shape_cast %46 : vector<16x1xf32> to vector<1x16x1xf32>
    %cst_16 = arith.constant dense<0x7F800000> : vector<1xf32>
    %48 = vector.multi_reduction <minimumf>, %47, %cst_16 [1, 2] : vector<1x16x1xf32> to vector<1xf32>
    %49 = vector.shape_cast %48 : vector<1xf32> to vector<1x1x1xf32>
    %50 = vector.extract %49[0, 0, 0] : f32 from vector<1x1x1xf32>
    %51 = vector.broadcast %50 : f32 to vector<16x1xf32>
    %52 = arith.cmpf ole, %46, %51 : vector<16x1xf32>
    %cst_17 = arith.constant 1.600000e+01 : f32
    %53 = vector.broadcast %cst_17 : f32 to vector<16x1xf32>
    %54 = arith.select %52, %20, %53 : vector<16x1xi1>, vector<16x1xf32>
    %55 = vector.shape_cast %54 : vector<16x1xf32> to vector<1x16x1xf32>
    %cst_18 = arith.constant dense<0x7F800000> : vector<1xf32>
    %56 = vector.multi_reduction <minimumf>, %55, %cst_18 [1, 2] : vector<1x16x1xf32> to vector<1xf32>
    %57 = vector.shape_cast %56 : vector<1xf32> to vector<1x1x1xf32>
    %58 = vector.extract %57[0, 0, 0] : f32 from vector<1x1x1xf32>
    %59 = vector.broadcast %58 : f32 to vector<16x1xf32>
    %60 = arith.cmpf oeq, %20, %59 : vector<16x1xf32>
    %61 = arith.ori %25, %60 : vector<16x1xi1>
    %62 = arith.extui %29 : vector<16x8xi1> to vector<16x8xi32>
    %63 = arith.sitofp %62 : vector<16x8xi32> to vector<16x8xf32>
    %64 = vector.shape_cast %60 : vector<16x1xi1> to vector<16x1xi1>
    %65 = vector.broadcast %64 : vector<16x1xi1> to vector<16x8xi1>
    %66 = arith.select %65, %63, %24 : vector<16x8xi1>, vector<16x8xf32>
    %cst_19 = arith.constant 0.000000e+00 : f32
    %67 = vector.broadcast %cst_19 : f32 to vector<16x1xf32>
    %68 = arith.select %60, %39, %67 : vector<16x1xi1>, vector<16x1xf32>
    %69 = vector.shape_cast %68 : vector<16x1xf32> to vector<1x16x1xf32>
    %cst_20 = arith.constant dense<0.000000e+00> : vector<1xf32>
    %70 = vector.multi_reduction <add>, %69, %cst_20 [1, 2] : vector<1x16x1xf32> to vector<1xf32>
    %71 = vector.shape_cast %70 : vector<1xf32> to vector<1x1x1xf32>
    %72 = vector.extract %71[0, 0, 0] : f32 from vector<1x1x1xf32>
    %cst_21 = arith.constant 0.000000e+00 : f32
    %73 = arith.addf %cst_21, %72 : f32
    %74 = arith.index_cast %arg0 : i32 to index
    %c1 = arith.constant 1 : index
    %75 = memref.load %arg1[%74, %c1] : memref<2x4xi32, #tpu.memory_space<smem>>
    %76 = vector.broadcast %75 : i32 to vector<16x8xi32>
    %77 = arith.cmpi eq, %18, %76 : vector<16x8xi32>
    %cst_22 = arith.constant 0.000000e+00 : f32
    %78 = vector.broadcast %cst_22 : f32 to vector<16x8xf32>
    %79 = arith.select %77, %15, %78 : vector<16x8xi1>, vector<16x8xf32>
    %cst_23 = arith.constant dense<0.000000e+00> : vector<16xf32>
    %80 = vector.multi_reduction <add>, %79, %cst_23 [1] : vector<16x8xf32> to vector<16xf32>
    %81 = vector.shape_cast %80 : vector<16xf32> to vector<16x1xf32>
    %82 = vector.extract_strided_slice %5 {offsets = [1, 0], sizes = [1, 4], strides = [1, 1]} : vector<4x4xf32> to vector<1x4xf32>
    %83 = vector.broadcast %82 : vector<1x4xf32> to vector<16x4xf32>
    %84 = arith.subf %3, %83 : vector<16x4xf32>
    %85 = math.absf %84 : vector<16x4xf32>
    %cst_24 = arith.constant dense<0.000000e+00> : vector<16xf32>
    %86 = vector.multi_reduction <add>, %85, %cst_24 [1] : vector<16x4xf32> to vector<16xf32>
    %87 = vector.shape_cast %86 : vector<16xf32> to vector<16x1xf32>
    %cst_25 = arith.constant 5.000000e+00 : f32
    %88 = vector.broadcast %cst_25 : f32 to vector<16x1xf32>
    %89 = arith.mulf %88, %87 : vector<16x1xf32>
    %cst_26 = arith.constant 1.000000e+00 : f32
    %90 = vector.broadcast %cst_26 : f32 to vector<16x1xf32>
    %91 = arith.mulf %90, %81 : vector<16x1xf32>
    %92 = arith.subf %89, %91 : vector<16x1xf32>
    %cst_27 = arith.constant 1.000000e+30 : f32
    %93 = vector.broadcast %cst_27 : f32 to vector<16x1xf32>
    %94 = arith.select %61, %93, %92 : vector<16x1xi1>, vector<16x1xf32>
    %95 = vector.shape_cast %94 : vector<16x1xf32> to vector<1x16x1xf32>
    %cst_28 = arith.constant dense<0x7F800000> : vector<1xf32>
    %96 = vector.multi_reduction <minimumf>, %95, %cst_28 [1, 2] : vector<1x16x1xf32> to vector<1xf32>
    %97 = vector.shape_cast %96 : vector<1xf32> to vector<1x1x1xf32>
    %98 = vector.extract %97[0, 0, 0] : f32 from vector<1x1x1xf32>
    %99 = vector.broadcast %98 : f32 to vector<16x1xf32>
    %100 = arith.cmpf ole, %94, %99 : vector<16x1xf32>
    %cst_29 = arith.constant 1.600000e+01 : f32
    %101 = vector.broadcast %cst_29 : f32 to vector<16x1xf32>
    %102 = arith.select %100, %20, %101 : vector<16x1xi1>, vector<16x1xf32>
    %103 = vector.shape_cast %102 : vector<16x1xf32> to vector<1x16x1xf32>
    %cst_30 = arith.constant dense<0x7F800000> : vector<1xf32>
    %104 = vector.multi_reduction <minimumf>, %103, %cst_30 [1, 2] : vector<1x16x1xf32> to vector<1xf32>
    %105 = vector.shape_cast %104 : vector<1xf32> to vector<1x1x1xf32>
    %106 = vector.extract %105[0, 0, 0] : f32 from vector<1x1x1xf32>
    %107 = vector.broadcast %106 : f32 to vector<16x1xf32>
    %108 = arith.cmpf oeq, %20, %107 : vector<16x1xf32>
    %109 = arith.ori %61, %108 : vector<16x1xi1>
    %110 = arith.extui %77 : vector<16x8xi1> to vector<16x8xi32>
    %111 = arith.sitofp %110 : vector<16x8xi32> to vector<16x8xf32>
    %112 = vector.shape_cast %108 : vector<16x1xi1> to vector<16x1xi1>
    %113 = vector.broadcast %112 : vector<16x1xi1> to vector<16x8xi1>
    %114 = arith.select %113, %111, %66 : vector<16x8xi1>, vector<16x8xf32>
    %cst_31 = arith.constant 0.000000e+00 : f32
    %115 = vector.broadcast %cst_31 : f32 to vector<16x1xf32>
    %116 = arith.select %108, %87, %115 : vector<16x1xi1>, vector<16x1xf32>
    %117 = vector.shape_cast %116 : vector<16x1xf32> to vector<1x16x1xf32>
    %cst_32 = arith.constant dense<0.000000e+00> : vector<1xf32>
    %118 = vector.multi_reduction <add>, %117, %cst_32 [1, 2] : vector<1x16x1xf32> to vector<1xf32>
    %119 = vector.shape_cast %118 : vector<1xf32> to vector<1x1x1xf32>
    %120 = vector.extract %119[0, 0, 0] : f32 from vector<1x1x1xf32>
    %121 = arith.addf %73, %120 : f32
    %122 = arith.index_cast %arg0 : i32 to index
    %c2 = arith.constant 2 : index
    %123 = memref.load %arg1[%122, %c2] : memref<2x4xi32, #tpu.memory_space<smem>>
    %124 = vector.broadcast %123 : i32 to vector<16x8xi32>
    %125 = arith.cmpi eq, %18, %124 : vector<16x8xi32>
    %cst_33 = arith.constant 0.000000e+00 : f32
    %126 = vector.broadcast %cst_33 : f32 to vector<16x8xf32>
    %127 = arith.select %125, %15, %126 : vector<16x8xi1>, vector<16x8xf32>
    %cst_34 = arith.constant dense<0.000000e+00> : vector<16xf32>
    %128 = vector.multi_reduction <add>, %127, %cst_34 [1] : vector<16x8xf32> to vector<16xf32>
    %129 = vector.shape_cast %128 : vector<16xf32> to vector<16x1xf32>
    %130 = vector.extract_strided_slice %5 {offsets = [2, 0], sizes = [1, 4], strides = [1, 1]} : vector<4x4xf32> to vector<1x4xf32>
    %131 = vector.broadcast %130 : vector<1x4xf32> to vector<16x4xf32>
    %132 = arith.subf %3, %131 : vector<16x4xf32>
    %133 = math.absf %132 : vector<16x4xf32>
    %cst_35 = arith.constant dense<0.000000e+00> : vector<16xf32>
    %134 = vector.multi_reduction <add>, %133, %cst_35 [1] : vector<16x4xf32> to vector<16xf32>
    %135 = vector.shape_cast %134 : vector<16xf32> to vector<16x1xf32>
    %cst_36 = arith.constant 5.000000e+00 : f32
    %136 = vector.broadcast %cst_36 : f32 to vector<16x1xf32>
    %137 = arith.mulf %136, %135 : vector<16x1xf32>
    %cst_37 = arith.constant 1.000000e+00 : f32
    %138 = vector.broadcast %cst_37 : f32 to vector<16x1xf32>
    %139 = arith.mulf %138, %129 : vector<16x1xf32>
    %140 = arith.subf %137, %139 : vector<16x1xf32>
    %cst_38 = arith.constant 1.000000e+30 : f32
    %141 = vector.broadcast %cst_38 : f32 to vector<16x1xf32>
    %142 = arith.select %109, %141, %140 : vector<16x1xi1>, vector<16x1xf32>
    %143 = vector.shape_cast %142 : vector<16x1xf32> to vector<1x16x1xf32>
    %cst_39 = arith.constant dense<0x7F800000> : vector<1xf32>
    %144 = vector.multi_reduction <minimumf>, %143, %cst_39 [1, 2] : vector<1x16x1xf32> to vector<1xf32>
    %145 = vector.shape_cast %144 : vector<1xf32> to vector<1x1x1xf32>
    %146 = vector.extract %145[0, 0, 0] : f32 from vector<1x1x1xf32>
    %147 = vector.broadcast %146 : f32 to vector<16x1xf32>
    %148 = arith.cmpf ole, %142, %147 : vector<16x1xf32>
    %cst_40 = arith.constant 1.600000e+01 : f32
    %149 = vector.broadcast %cst_40 : f32 to vector<16x1xf32>
    %150 = arith.select %148, %20, %149 : vector<16x1xi1>, vector<16x1xf32>
    %151 = vector.shape_cast %150 : vector<16x1xf32> to vector<1x16x1xf32>
    %cst_41 = arith.constant dense<0x7F800000> : vector<1xf32>
    %152 = vector.multi_reduction <minimumf>, %151, %cst_41 [1, 2] : vector<1x16x1xf32> to vector<1xf32>
    %153 = vector.shape_cast %152 : vector<1xf32> to vector<1x1x1xf32>
    %154 = vector.extract %153[0, 0, 0] : f32 from vector<1x1x1xf32>
    %155 = vector.broadcast %154 : f32 to vector<16x1xf32>
    %156 = arith.cmpf oeq, %20, %155 : vector<16x1xf32>
    %157 = arith.ori %109, %156 : vector<16x1xi1>
    %158 = arith.extui %125 : vector<16x8xi1> to vector<16x8xi32>
    %159 = arith.sitofp %158 : vector<16x8xi32> to vector<16x8xf32>
    %160 = vector.shape_cast %156 : vector<16x1xi1> to vector<16x1xi1>
    %161 = vector.broadcast %160 : vector<16x1xi1> to vector<16x8xi1>
    %162 = arith.select %161, %159, %114 : vector<16x8xi1>, vector<16x8xf32>
    %cst_42 = arith.constant 0.000000e+00 : f32
    %163 = vector.broadcast %cst_42 : f32 to vector<16x1xf32>
    %164 = arith.select %156, %135, %163 : vector<16x1xi1>, vector<16x1xf32>
    %165 = vector.shape_cast %164 : vector<16x1xf32> to vector<1x16x1xf32>
    %cst_43 = arith.constant dense<0.000000e+00> : vector<1xf32>
    %166 = vector.multi_reduction <add>, %165, %cst_43 [1, 2] : vector<1x16x1xf32> to vector<1xf32>
    %167 = vector.shape_cast %166 : vector<1xf32> to vector<1x1x1xf32>
    %168 = vector.extract %167[0, 0, 0] : f32 from vector<1x1x1xf32>
    %169 = arith.addf %121, %168 : f32
    %170 = arith.index_cast %arg0 : i32 to index
    %c3 = arith.constant 3 : index
    %171 = memref.load %arg1[%170, %c3] : memref<2x4xi32, #tpu.memory_space<smem>>
    %172 = vector.broadcast %171 : i32 to vector<16x8xi32>
    %173 = arith.cmpi eq, %18, %172 : vector<16x8xi32>
    %cst_44 = arith.constant 0.000000e+00 : f32
    %174 = vector.broadcast %cst_44 : f32 to vector<16x8xf32>
    %175 = arith.select %173, %15, %174 : vector<16x8xi1>, vector<16x8xf32>
    %cst_45 = arith.constant dense<0.000000e+00> : vector<16xf32>
    %176 = vector.multi_reduction <add>, %175, %cst_45 [1] : vector<16x8xf32> to vector<16xf32>
    %177 = vector.shape_cast %176 : vector<16xf32> to vector<16x1xf32>
    %178 = vector.extract_strided_slice %5 {offsets = [3, 0], sizes = [1, 4], strides = [1, 1]} : vector<4x4xf32> to vector<1x4xf32>
    %179 = vector.broadcast %178 : vector<1x4xf32> to vector<16x4xf32>
    %180 = arith.subf %3, %179 : vector<16x4xf32>
    %181 = math.absf %180 : vector<16x4xf32>
    %cst_46 = arith.constant dense<0.000000e+00> : vector<16xf32>
    %182 = vector.multi_reduction <add>, %181, %cst_46 [1] : vector<16x4xf32> to vector<16xf32>
    %183 = vector.shape_cast %182 : vector<16xf32> to vector<16x1xf32>
    %cst_47 = arith.constant 5.000000e+00 : f32
    %184 = vector.broadcast %cst_47 : f32 to vector<16x1xf32>
    %185 = arith.mulf %184, %183 : vector<16x1xf32>
    %cst_48 = arith.constant 1.000000e+00 : f32
    %186 = vector.broadcast %cst_48 : f32 to vector<16x1xf32>
    %187 = arith.mulf %186, %177 : vector<16x1xf32>
    %188 = arith.subf %185, %187 : vector<16x1xf32>
    %cst_49 = arith.constant 1.000000e+30 : f32
    %189 = vector.broadcast %cst_49 : f32 to vector<16x1xf32>
    %190 = arith.select %157, %189, %188 : vector<16x1xi1>, vector<16x1xf32>
    %191 = vector.shape_cast %190 : vector<16x1xf32> to vector<1x16x1xf32>
    %cst_50 = arith.constant dense<0x7F800000> : vector<1xf32>
    %192 = vector.multi_reduction <minimumf>, %191, %cst_50 [1, 2] : vector<1x16x1xf32> to vector<1xf32>
    %193 = vector.shape_cast %192 : vector<1xf32> to vector<1x1x1xf32>
    %194 = vector.extract %193[0, 0, 0] : f32 from vector<1x1x1xf32>
    %195 = vector.broadcast %194 : f32 to vector<16x1xf32>
    %196 = arith.cmpf ole, %190, %195 : vector<16x1xf32>
    %cst_51 = arith.constant 1.600000e+01 : f32
    %197 = vector.broadcast %cst_51 : f32 to vector<16x1xf32>
    %198 = arith.select %196, %20, %197 : vector<16x1xi1>, vector<16x1xf32>
    %199 = vector.shape_cast %198 : vector<16x1xf32> to vector<1x16x1xf32>
    %cst_52 = arith.constant dense<0x7F800000> : vector<1xf32>
    %200 = vector.multi_reduction <minimumf>, %199, %cst_52 [1, 2] : vector<1x16x1xf32> to vector<1xf32>
    %201 = vector.shape_cast %200 : vector<1xf32> to vector<1x1x1xf32>
    %202 = vector.extract %201[0, 0, 0] : f32 from vector<1x1x1xf32>
    %203 = vector.broadcast %202 : f32 to vector<16x1xf32>
    %204 = arith.cmpf oeq, %20, %203 : vector<16x1xf32>
    %205 = arith.extui %173 : vector<16x8xi1> to vector<16x8xi32>
    %206 = arith.sitofp %205 : vector<16x8xi32> to vector<16x8xf32>
    %207 = vector.shape_cast %204 : vector<16x1xi1> to vector<16x1xi1>
    %208 = vector.broadcast %207 : vector<16x1xi1> to vector<16x8xi1>
    %209 = arith.select %208, %206, %162 : vector<16x8xi1>, vector<16x8xf32>
    %cst_53 = arith.constant 0.000000e+00 : f32
    %210 = vector.broadcast %cst_53 : f32 to vector<16x1xf32>
    %211 = arith.select %204, %183, %210 : vector<16x1xi1>, vector<16x1xf32>
    %212 = vector.shape_cast %211 : vector<16x1xf32> to vector<1x16x1xf32>
    %cst_54 = arith.constant dense<0.000000e+00> : vector<1xf32>
    %213 = vector.multi_reduction <add>, %212, %cst_54 [1, 2] : vector<1x16x1xf32> to vector<1xf32>
    %214 = vector.shape_cast %213 : vector<1xf32> to vector<1x1x1xf32>
    %215 = vector.extract %214[0, 0, 0] : f32 from vector<1x1x1xf32>
    %216 = arith.addf %169, %215 : f32
    %217 = vector.extract_strided_slice %209 {offsets = [0, 7], sizes = [16, 1], strides = [1, 1]} : vector<16x8xf32> to vector<16x1xf32>
    %cst_55 = arith.constant 1.000000e+00 : f32
    %218 = vector.broadcast %cst_55 : f32 to vector<16x1xf32>
    %219 = arith.subf %218, %217 : vector<16x1xf32>
    %220 = arith.mulf %209, %1 : vector<16x8xf32>
    %cst_56 = arith.constant dense<0.000000e+00> : vector<16xf32>
    %221 = vector.multi_reduction <add>, %220, %cst_56 [1] : vector<16x8xf32> to vector<16xf32>
    %222 = vector.shape_cast %221 : vector<16xf32> to vector<16x1xf32>
    %223 = arith.subf %17, %222 : vector<16x1xf32>
    %cst_57 = arith.constant 0.899999976 : f32
    %224 = vector.broadcast %cst_57 : f32 to vector<16x1xf32>
    %225 = arith.mulf %224, %219 : vector<16x1xf32>
    %cst_58 = arith.constant 1.000000e-01 : f32
    %226 = vector.broadcast %cst_58 : f32 to vector<16x1xf32>
    %227 = arith.addf %226, %225 : vector<16x1xf32>
    %228 = arith.mulf %227, %223 : vector<16x1xf32>
    %229 = vector.shape_cast %228 : vector<16x1xf32> to vector<1x16x1xf32>
    %cst_59 = arith.constant dense<0.000000e+00> : vector<1xf32>
    %230 = vector.multi_reduction <add>, %229, %cst_59 [1, 2] : vector<1x16x1xf32> to vector<1xf32>
    %231 = vector.shape_cast %230 : vector<1xf32> to vector<1x1x1xf32>
    %232 = vector.extract %231[0, 0, 0] : f32 from vector<1x1x1xf32>
    %233 = vector.shape_cast %227 : vector<16x1xf32> to vector<1x16x1xf32>
    %cst_60 = arith.constant dense<0.000000e+00> : vector<1xf32>
    %234 = vector.multi_reduction <add>, %233, %cst_60 [1, 2] : vector<1x16x1xf32> to vector<1xf32>
    %235 = vector.shape_cast %234 : vector<1xf32> to vector<1x1x1xf32>
    %236 = vector.extract %235[0, 0, 0] : f32 from vector<1x1x1xf32>
    %237 = vector.broadcast %7 : vector<16x1xf32> to vector<16x8xf32>
    %238 = arith.cmpf oge, %1, %237 : vector<16x8xf32>
    %c8_i32 = arith.constant 8 : i32
    %239 = vector.broadcast %c8_i32 : i32 to vector<16x8xi32>
    %240 = arith.select %238, %18, %239 : vector<16x8xi1>, vector<16x8xi32>
    %cst_61 = arith.constant dense<2147483647> : vector<16xi32>
    %241 = vector.multi_reduction <minsi>, %240, %cst_61 [1] : vector<16x8xi32> to vector<16xi32>
    %242 = vector.shape_cast %241 : vector<16xi32> to vector<16x1xi32>
    %c7_i32_62 = arith.constant 7 : i32
    %243 = vector.broadcast %c7_i32_62 : i32 to vector<16x1xi32>
    %244 = arith.cmpi ne, %242, %243 : vector<16x1xi32>
    %245 = arith.extui %244 : vector<16x1xi1> to vector<16x1xi32>
    %246 = arith.sitofp %245 : vector<16x1xi32> to vector<16x1xf32>
    %247 = vector.shape_cast %246 : vector<16x1xf32> to vector<1x16x1xf32>
    %cst_63 = arith.constant dense<0.000000e+00> : vector<1xf32>
    %248 = vector.multi_reduction <add>, %247, %cst_63 [1, 2] : vector<1x16x1xf32> to vector<1xf32>
    %249 = vector.shape_cast %248 : vector<1xf32> to vector<1x1x1xf32>
    %250 = vector.extract %249[0, 0, 0] : f32 from vector<1x1x1xf32>
    %cst_64 = arith.constant 4.000000e+00 : f32
    %251 = arith.subf %250, %cst_64 : f32
    %252 = math.absf %251 : f32
    %253 = tpu.iota {dimensions = array<i32: 1>} : vector<1x128xi32>
    %c0_i32 = arith.constant 0 : i32
    %254 = vector.broadcast %c0_i32 : i32 to vector<1x128xi32>
    %255 = arith.cmpi eq, %253, %254 : vector<1x128xi32>
    %cst_65 = arith.constant 0.000000e+00 : f32
    %256 = vector.broadcast %232 : f32 to vector<1x128xf32>
    %257 = vector.broadcast %cst_65 : f32 to vector<1x128xf32>
    %258 = arith.select %255, %256, %257 : vector<1x128xi1>, vector<1x128xf32>
    %c1_i32 = arith.constant 1 : i32
    %259 = vector.broadcast %c1_i32 : i32 to vector<1x128xi32>
    %260 = arith.cmpi eq, %253, %259 : vector<1x128xi32>
    %cst_66 = arith.constant 0.000000e+00 : f32
    %261 = vector.broadcast %236 : f32 to vector<1x128xf32>
    %262 = vector.broadcast %cst_66 : f32 to vector<1x128xf32>
    %263 = arith.select %260, %261, %262 : vector<1x128xi1>, vector<1x128xf32>
    %264 = arith.addf %258, %263 : vector<1x128xf32>
    %c2_i32 = arith.constant 2 : i32
    %265 = vector.broadcast %c2_i32 : i32 to vector<1x128xi32>
    %266 = arith.cmpi eq, %253, %265 : vector<1x128xi32>
    %cst_67 = arith.constant 0.000000e+00 : f32
    %267 = vector.broadcast %252 : f32 to vector<1x128xf32>
    %268 = vector.broadcast %cst_67 : f32 to vector<1x128xf32>
    %269 = arith.select %266, %267, %268 : vector<1x128xi1>, vector<1x128xf32>
    %270 = arith.addf %264, %269 : vector<1x128xf32>
    %c3_i32 = arith.constant 3 : i32
    %271 = vector.broadcast %c3_i32 : i32 to vector<1x128xi32>
    %272 = arith.cmpi eq, %253, %271 : vector<1x128xi32>
    %cst_68 = arith.constant 0.000000e+00 : f32
    %273 = vector.broadcast %216 : f32 to vector<1x128xf32>
    %274 = vector.broadcast %cst_68 : f32 to vector<1x128xf32>
    %275 = arith.select %272, %273, %274 : vector<1x128xi1>, vector<1x128xf32>
    %276 = arith.addf %270, %275 : vector<1x128xf32>
    %c0_69 = arith.constant 0 : index
    %c0_70 = arith.constant 0 : index
    %c0_71 = arith.constant 0 : index
    %277 = vector.load %arg5[%c0_69, %c0_70, %c0_71] : memref<1x1x128xf32, #tpu.memory_space<vmem>>, vector<1x1x128xf32>
    %278 = vector.shape_cast %277 : vector<1x1x128xf32> to vector<1x128xf32>
    %279 = vector.shape_cast %276 : vector<1x128xf32> to vector<1x1x128xf32>
    tpu.vector_store %arg5[%c0_69, %c0_70, %c0_71], %279 {strides = array<i32>} : memref<1x1x128xf32, #tpu.memory_space<vmem>>, vector<1x1x128xf32>,
    return
  }
  func.func @transform_0(%arg0: i32, %arg1: memref<2x4xi32, #tpu.memory_space<smem>>) -> (i32, i32, i32) {
    %c0_i32 = arith.constant 0 : i32
    %c0_i32_0 = arith.constant 0 : i32
    %c0_i32_1 = arith.constant 0 : i32
    return %arg0, %c0_i32, %c0_i32_0 : i32, i32, i32
  }
  func.func @transform_1(%arg0: i32, %arg1: memref<2x4xi32, #tpu.memory_space<smem>>) -> (i32, i32, i32) {
    %c0_i32 = arith.constant 0 : i32
    %c0_i32_0 = arith.constant 0 : i32
    %c0_i32_1 = arith.constant 0 : i32
    return %arg0, %c0_i32, %c0_i32_0 : i32, i32, i32
  }
  func.func @transform_2(%arg0: i32, %arg1: memref<2x4xi32, #tpu.memory_space<smem>>) -> (i32, i32, i32) {
    %c0_i32 = arith.constant 0 : i32
    %c0_i32_0 = arith.constant 0 : i32
    %c0_i32_1 = arith.constant 0 : i32
    return %arg0, %c0_i32, %c0_i32_0 : i32, i32, i32
  }
  func.func @transform_3(%arg0: i32, %arg1: memref<2x4xi32, #tpu.memory_space<smem>>) -> (i32, i32, i32) {
    %c0_i32 = arith.constant 0 : i32
    %c0_i32_0 = arith.constant 0 : i32
    %c0_i32_1 = arith.constant 0 : i32
    return %arg0, %c0_i32, %c0_i32_0 : i32, i32, i32
  }
}

</mosaic_0001>

<llo_original>
// kernel: set_criterion_forward.1
$region0: #{set_criterion_forward.1}
  #allocation0 [shape = 'u32[]', space=smem, size = 0x4, offset = 0x4, fixed_abs, tag = 'smem constant byte address 0x4 - core index']
  #allocation1 [shape = 'u32[144,128]{1,0:T(1,128)}', space=vmem, size = 0x12000, scoped, tag = 'internal scratch']
  #allocation2 [shape = 's32[1]{0}', space=sflag, size = 0x4, scoped, tag = 'scoped memory for set_criterion_forward.1']
  #allocation3 [shape = 'u8[1024]{0}', space=smem, size = 0x400, scoped, tag = 'prefetched SMEM operand 0']
  %s0 = inlined_call_operand.vmem [shape: s32[2,4], index: 0, kind: input, shape index: {}]
  %s1 = inlined_call_operand.vmem [shape: f32[2,16,8], index: 1, kind: input, shape index: {}]
  %s2 = inlined_call_operand.vmem [shape: f32[2,16,4], index: 2, kind: input, shape index: {}]
  %s3 = inlined_call_operand.vmem [shape: f32[2,4,4], index: 3, kind: input, shape index: {}]
  %s4 = inlined_call_operand.vmem [shape: f32[2,1,128], index: 4, kind: output, shape index: {}]
  %s5 = sld [smem:[#allocation0]]
  $region45: #{set_criterion_forward.1} parent=0
    _
  %s7 = ssub.s32 1, %s5
  %s8 = scalar_select 0, %s7, %s5
  %s9 = sshll.u32 %s0, 4
  %s10 = int_to_ptr.vmem [resolvable:$true] %s9
  %12 = dma.vmem_to_smem %s10, 32, [#allocation3], [#allocation2]
  %13 = dma.done [#allocation2], 32
  %14 = sfence
  loop: start=0, step=1, limit=4
  $region2: #{set_criterion_forward.1} parent=0 // loop_pre_header
    _
  $region3: #{set_criterion_forward.1} parent=0 // loop_header
    %s16 = sphi 0, %s20
    %p17 = scmp.ge.s32.totalorder %s16, 4
    %s26 = sphi 0, %s28
    %s29 = sphi 0, %s26
    %s30 = sphi 0, %s29
    %s46 = sphi 0, %s30
    %s52 = sphi 0, %s54
    %s55 = sphi 0, %s52
    %s56 = sphi 0, %s55
    %s72 = sphi 0, %s56
    %s78 = sphi 0, %s80
    %s81 = sphi 0, %s78
    %s82 = sphi 0, %s81
    %s98 = sphi 0, %s82
    %s104 = sphi 0, %s106
    %s107 = sphi 0, %s104
    %s108 = sphi 0, %s107
    %s124 = sphi 0, %s108
  $region4: #{set_criterion_forward.1} parent=0 // loop_header_branch
    %19 = sbr.rel (%p17) target = $region8
  $region5: #{set_criterion_forward.1} parent=0 // loop_body
    %s21 = ssub.s32 %s16, 1
    %s22 = ssub.s32 %s16, 2
    %s23 = sadd.s32 %s16, 1
    %s24 = ssub.s32 %s16, %s23
    %p25 = scmp.eq.s32.totalorder %s24, 0
    %s27 = sadd.s32 %s26, 1
    %s28 = scalar_select %p25, %s26, %s27
    %p31 = pneg %p25
    %p32 = scmp.eq.s32.totalorder %s16, 1
    %p33 = por %p31, %p32
    %p34 = scmp.ne.s32.totalorder %s26, %s29
    %p35 = scmp.eq.s32.totalorder %s16, 0
    %p36 = por %p34, %p35
    %p37 = scmp.ne.s32.totalorder %s26, %s29
    %p38 = scmp.eq.s32.totalorder %s21, 1
    %p39 = por %p37, %p38
    %p40 = scmp.ne.s32.totalorder %s29, %s30
    %p41 = scmp.eq.s32.totalorder %s21, 0
    %p42 = por %p40, %p41
    %p43 = scmp.ne.s32.totalorder %s29, %s30
    %p44 = scmp.eq.s32.totalorder %s22, 1
    %p45 = por %p43, %p44
    %p47 = scmp.ne.s32.totalorder %s30, %s46
    %p48 = scmp.eq.s32.totalorder %s22, 0
    %p49 = por %p47, %p48
    %s50 = ssub.s32 %s16, %s23
    %p51 = scmp.eq.s32.totalorder %s50, 0
    %s53 = sadd.s32 %s52, 1
    %s54 = scalar_select %p51, %s52, %s53
    %p57 = pneg %p51
    %p58 = scmp.eq.s32.totalorder %s16, 1
    %p59 = por %p57, %p58
    %p60 = scmp.ne.s32.totalorder %s52, %s55
    %p61 = scmp.eq.s32.totalorder %s16, 0
    %p62 = por %p60, %p61
    %p63 = scmp.ne.s32.totalorder %s52, %s55
    %p64 = scmp.eq.s32.totalorder %s21, 1
    %p65 = por %p63, %p64
    %p66 = scmp.ne.s32.totalorder %s55, %s56
    %p67 = scmp.eq.s32.totalorder %s21, 0
    %p68 = por %p66, %p67
    %p69 = scmp.ne.s32.totalorder %s55, %s56
    %p70 = scmp.eq.s32.totalorder %s22, 1
    %p71 = por %p69, %p70
    %p73 = scmp.ne.s32.totalorder %s56, %s72
    %p74 = scmp.eq.s32.totalorder %s22, 0
    %p75 = por %p73, %p74
    %s76 = ssub.s32 %s16, %s23
    %p77 = scmp.eq.s32.totalorder %s76, 0
    %s79 = sadd.s32 %s78, 1
    %s80 = scalar_select %p77, %s78, %s79
    %p83 = pneg %p77
    %p84 = scmp.eq.s32.totalorder %s16, 1
    %p85 = por %p83, %p84
    %p86 = scmp.ne.s32.totalorder %s78, %s81
    %p87 = scmp.eq.s32.totalorder %s16, 0
    %p88 = por %p86, %p87
    %p89 = scmp.ne.s32.totalorder %s78, %s81
    %p90 = scmp.eq.s32.totalorder %s21, 1
    %p91 = por %p89, %p90
    %p92 = scmp.ne.s32.totalorder %s81, %s82
    %p93 = scmp.eq.s32.totalorder %s21, 0
    %p94 = por %p92, %p93
    %p95 = scmp.ne.s32.totalorder %s81, %s82
    %p96 = scmp.eq.s32.totalorder %s22, 1
    %p97 = por %p95, %p96
    %p99 = scmp.ne.s32.totalorder %s82, %s98
    %p100 = scmp.eq.s32.totalorder %s22, 0
    %p101 = por %p99, %p100
    %s102 = ssub.s32 %s16, %s23
    %p103 = scmp.eq.s32.totalorder %s102, 0
    %s105 = sadd.s32 %s104, 1
    %s106 = scalar_select %p103, %s104, %s105
    %p109 = pneg %p103
    %p110 = scmp.eq.s32.totalorder %s16, 1
    %p111 = por %p109, %p110
    %p112 = scmp.ne.s32.totalorder %s104, %s107
    %p113 = scmp.eq.s32.totalorder %s16, 0
    %p114 = por %p112, %p113
    %p115 = scmp.ne.s32.totalorder %s104, %s107
    %p116 = scmp.eq.s32.totalorder %s21, 1
    %p117 = por %p115, %p116
    %p118 = scmp.ne.s32.totalorder %s107, %s108
    %p119 = scmp.eq.s32.totalorder %s21, 0
    %p120 = por %p118, %p119
    %p121 = scmp.ne.s32.totalorder %s107, %s108
    %p122 = scmp.eq.s32.totalorder %s22, 1
    %p123 = por %p121, %p122
    %p125 = scmp.ne.s32.totalorder %s108, %s124
    %p126 = scmp.eq.s32.totalorder %s22, 0
    %p127 = por %p125, %p126
    %p128 = scmp.le.s32.totalorder 1, %s16
    %p129 = scmp.lt.s32.totalorder %s16, 3
    %p130 = pnand %p128, %p129
    %p131 = pneg %p130
    // Predicated region
    $region9: #{set_criterion_forward.1} parent=5 // pred_check
      _
    $region10: #{set_criterion_forward.1} parent=5 // pred_check_branch
      %133 = sbr.rel (%p130) target = $region12
    $region11: #{set_criterion_forward.1} parent=5 // pred_region
      %s134 = ssub.s32 %s16, 1
    $region12: #{set_criterion_forward.1} parent=5 // pred_fallthru
      _
    %p135 = scmp.lt.s32.totalorder %s16, 2
    // Predicated region
    $region13: #{set_criterion_forward.1} parent=5 // pred_check
      %p136 = pneg %p135
    $region14: #{set_criterion_forward.1} parent=5 // pred_check_branch
      %138 = sbr.rel (%p136) target = $region16
    $region15: #{set_criterion_forward.1} parent=5 // pred_region
      // Predicated region
      $region17: #{set_criterion_forward.1} parent=15 // pred_check
        %p139 = pneg %p36
      $region18: #{set_criterion_forward.1} parent=15 // pred_check_branch
        %141 = sbr.rel (%p139) target = $region20
      $region19: #{set_criterion_forward.1} parent=15 // pred_region
        %p142 = scmp.lt.s32.totalorder %s16, 1
        %s143 = scalar_select %p142, %s16, 1
        %s144 = smul.addr %s143, 2
        %s145 = smul.addr %s144, 8
        %s146 = scalar_lea.vmem %s1, %s145
      $region20: #{set_criterion_forward.1} parent=15 // pred_fallthru
        _
      // Predicated region
      $region21: #{set_criterion_forward.1} parent=15 // pred_check
        %p147 = pneg %p62
      $region22: #{set_criterion_forward.1} parent=15 // pred_check_branch
        %149 = sbr.rel (%p147) target = $region24
      $region23: #{set_criterion_forward.1} parent=15 // pred_region
        %p150 = scmp.lt.s32.totalorder %s16, 1
        %s151 = scalar_select %p150, %s16, 1
        %s152 = smul.addr %s151, 2
        %s153 = smul.addr %s152, 8
        %s154 = scalar_lea.vmem %s2, %s153
      $region24: #{set_criterion_forward.1} parent=15 // pred_fallthru
        _
      // Predicated region
      $region25: #{set_criterion_forward.1} parent=15 // pred_check
        %p155 = pneg %p88
      $region26: #{set_criterion_forward.1} parent=15 // pred_check_branch
        %157 = sbr.rel (%p155) target = $region28
      $region27: #{set_criterion_forward.1} parent=15 // pred_region
        %p158 = scmp.lt.s32.totalorder %s16, 1
        %s159 = scalar_select %p158, %s16, 1
        %s160 = smul.addr %s159, 4
        %s161 = scalar_lea.vmem %s3, %s160
      $region28: #{set_criterion_forward.1} parent=15 // pred_fallthru
        _
    $region16: #{set_criterion_forward.1} parent=5 // pred_fallthru
      _
    %p162 = scmp.le.s32.totalorder 1, %s16
    %p163 = scmp.lt.s32.totalorder %s16, 3
    %p164 = pnand %p162, %p163
    %p165 = pneg %p164
    // Predicated region
    $region29: #{set_criterion_forward.1} parent=5 // pred_check
      _
    $region30: #{set_criterion_forward.1} parent=5 // pred_check_branch
      %167 = sbr.rel (%p164) target = $region32
    $region31: #{set_criterion_forward.1} parent=5 // pred_region
      %s168 = ssub.s32 %s16, 1
      %p169 = scmp.lt.s32.totalorder %s21, 1
      %s170 = scalar_select %p169, %s21, 1
      %s171 = smul.addr %s170, 2
      %s172 = smul.addr %s171, 8
      %s173 = scalar_lea.vmem %s1, %s172
      %p174 = pneg %p42
      %p175 = pneg %p39
      %p176 = scmp.lt.s32.totalorder %s21, 1
      %s177 = scalar_select %p176, %s21, 1
      %s178 = smul.addr %s177, 2
      %s179 = smul.addr %s178, 8
      %s180 = scalar_lea.vmem %s2, %s179
      %p181 = pneg %p68
      %p182 = pneg %p65
      %p183 = scmp.lt.s32.totalorder %s21, 1
      %s184 = scalar_select %p183, %s21, 1
      %s185 = smul.addr %s184, 4
      %s186 = scalar_lea.vmem %s3, %s185
      %p187 = pneg %p94
      %p188 = pneg %p91
      %p189 = pneg %p120
      %p190 = pneg %p117
      %p191 = scmp.lt.s32.totalorder %s21, 1
      %s192 = scalar_select %p191, %s21, 1
      %s193 = scalar_lea.vmem %s4, %s192
      %p194 = scmp.lt.s32.totalorder %s21, 1
      %s195 = scalar_select %p194, %s21, 1
      %s196 = smul.addr %s195, 2
      %s197 = smul.addr %s196, 8
      %s198 = scalar_lea.vmem %s1, %s197
      %p199 = scmp.lt.s32.totalorder %s21, 1
      %s200 = scalar_select %p199, %s21, 1
      %s201 = smul.addr %s200, 2
      %s202 = smul.addr %s201, 8
      %s203 = scalar_lea.vmem %s2, %s202
      %p204 = scmp.lt.s32.totalorder %s21, 1
      %s205 = scalar_select %p204, %s21, 1
      %s206 = smul.addr %s205, 4
      %s207 = scalar_lea.vmem %s3, %s206
      %p208 = scmp.lt.s32.totalorder %s21, 1
      %s209 = scalar_select %p208, %s21, 1
      %s210 = scalar_lea.vmem %s4, %s209
      %v211 = vld [vmem:[%s198] sm:$0xff]
      %v212 = vld [vmem:[%s198 + $0x8] sm:$0xff]
      %v213 = vld [vmem:[%s203] sm:$0xff]
      %v214 = vld [vmem:[%s203 + $0x8] sm:$0xff]
      %v215 = vld [vmem:[%s207] sm:$0xf]
      %vm216 = vcmask 64512
      %v217 = vsel %vm216, %v211, -inf
      %218 = vmax.xlane.f32.xlu0 %v217
      %v219 = vpop.xlane.xlu0 %218
      %v220 = vsel %vm216, %v212, -inf
      %221 = vmax.xlane.f32.xlu0 %v220
      %v222 = vpop.xlane.xlu0 %221
      %v223 = vsub.f32 %v211, %v219
      %v224 = vsub.f32 %v212, %v222
      %v225 = vmul.f32 %v223, 1.442695
      %v226 = vpow.pop %v225
      %v227 = vmul.f32 %v224, 1.442695
      %v228 = vpow.pop %v227
      %v229 = vsel %vm216, %v226, 0.0
      %230 = vadd.xlane.f32.xlu0 %v229
      %v231 = vpop.xlane.xlu0 %230
      %v232 = vsel %vm216, %v228, 0.0
      %233 = vadd.xlane.f32.xlu0 %v232
      %v234 = vpop.xlane.xlu0 %233
      %v235 = vrcp.pop %v231
      %v236 = vrcp.pop %v234
      %v237 = vmul.f32 %v226, %v235
      %v238 = vmul.f32 %v228, %v236
      %v239 = vlog2.pop %v231
      %v240 = vmul.f32 %v239, 0.6931472
      %v241 = vlog2.pop %v234
      %v242 = vmul.f32 %v241, 0.6931472
      %v243 = vadd.f32 %v219, %v240
      %v244 = vadd.f32 %v222, %v242
      %v245 = vlaneseq
      %v246 = vand.u32 %v245, 127
      %v247 = vlaneseq
      %v248 = vshrl.u32 %v247, 7
      %v249 = vadd.s32 %v248, 8
      %v250 = vcvt.s32.f32 %v248
      %v251 = vcvt.s32.f32 %v249
      %vm252 = vcmp.eq.s32.totalorder %v246, 7
      %v253 = vsel %vm252, 1, 0
      %v254 = vcvt.s32.f32 %v253
      %s255 = smul.u32 %s21, 128
      %s256 = sld [smem:[#allocation3 + %s255]]
      %v257 = vstv %s256
      %vm258 = vcmp.eq.s32.totalorder %v246, %v257
      %v259 = vsel %vm258, %v237, 0.0
      %v260 = vsel %vm258, %v238, 0.0
      %v261 = vsel %vm216, %v259, 0.0
      %262 = vadd.xlane.f32.xlu0 %v261
      %v263 = vpop.xlane.xlu0 %262
      %v264 = vsel %vm216, %v260, 0.0
      %265 = vadd.xlane.f32.xlu0 %v264
      %v266 = vpop.xlane.xlu0 %265
      %v267 = vlaneseq
      %v268 = vshrl.u32 %v267, 7
      %v269 = vsub.s32 0, %v268
      %v270 = vrot.slane %v215, %v269
      %v271 = vsub.f32 %v213, %v270
      %v272 = vsub.f32 %v214, %v270
      %v273 = vand.u32 2147483647, %v271
      %v274 = vand.u32 2147483647, %v272
      %vm275 = vcmask 31744
      %v276 = vsel %vm275, %v273, 0.0
      %277 = vadd.xlane.f32.xlu0 %v276
      %v278 = vpop.xlane.xlu0 %277
      %v279 = vsel %vm275, %v274, 0.0
      %280 = vadd.xlane.f32.xlu0 %v279
      %v281 = vpop.xlane.xlu0 %280
      %v282 = vmul.f32 %v278, 5.0
      %v283 = vmul.f32 %v281, 5.0
      %v284 = vsub.f32 %v282, %v263
      %v285 = vsub.f32 %v283, %v266
      %v286 = vmin.f32 %v284, %v285
      %v287 = vrot.slane %v286, 4
      %v288 = vmin.f32 %v286, %v287
      %v289 = vrot.slane %v288, 2
      %v290 = vmin.f32 %v288, %v289
      %v291 = vrot.slane %v290, 1
      %v292 = vmin.f32 %v290, %v291
      %s293 = vtos %v292
      %v294 = vstv %s293
      %vm295 = vcmp.le.f32.partialorder %v284, %v294
      %vm296 = vcmp.le.f32.partialorder %v285, %v294
      %v297 = vsel %vm295, %v250, 16.0
      %v298 = vsel %vm296, %v251, 16.0
      %v299 = vmin.f32 %v297, %v298
      %v300 = vrot.slane %v299, 4
      %v301 = vmin.f32 %v299, %v300
      %v302 = vrot.slane %v301, 2
      %v303 = vmin.f32 %v301, %v302
      %v304 = vrot.slane %v303, 1
      %v305 = vmin.f32 %v303, %v304
      %s306 = vtos %v305
      %v307 = vstv %s306
      %vm308 = vcmp.eq.f32.partialorder %v250, %v307
      %vm309 = vcmp.eq.f32.partialorder %v251, %v307
      %v310 = vsel %vm258, 1, 0
      %v311 = vcvt.s32.f32 %v310
      %v312 = vsel %vm308, 1, 0
      %v313 = vsel %vm309, 1, 0
      %vm314 = vcmp.eq.s32.totalorder %v312, 1
      %vm315 = vcmp.eq.s32.totalorder %v313, 1
      %v316 = vsel %vm314, %v311, %v254
      %v317 = vsel %vm315, %v311, %v254
      %v318 = vsel %vm308, %v278, 0.0
      %v319 = vsel %vm309, %v281, 0.0
      %vm320 = vcmask 7168
      %v321 = vsel %vm320, %v318, 0.0
      %v322 = vsel %vm320, %v319, 0.0
      %v323 = vadd.f32 %v321, %v322
      %324 = vadd.xlane.f32.xlu0 %v323
      %v325 = vpop.xlane.xlu0 %324
      %v326 = vrot.slane %v325, 4
      %v327 = vadd.f32 %v325, %v326
      %v328 = vrot.slane %v327, 2
      %v329 = vadd.f32 %v327, %v328
      %v330 = vrot.slane %v329, 1
      %v331 = vadd.f32 %v329, %v330
      %s332 = vtos %v331
      %s333 = sadd.f32 %s332, 0.0
      %s334 = sadd.s32 %s255, 1
      %s335 = sld [smem:[#allocation3 + %s334]]
      %v336 = vstv %s335
      %vm337 = vcmp.eq.s32.totalorder %v246, %v336
      %v338 = vsel %vm337, %v237, 0.0
      %v339 = vsel %vm337, %v238, 0.0
      %v340 = vsel %vm216, %v338, 0.0
      %341 = vadd.xlane.f32.xlu0 %v340
      %v342 = vpop.xlane.xlu0 %341
      %v343 = vsel %vm216, %v339, 0.0
      %344 = vadd.xlane.f32.xlu0 %v343
      %v345 = vpop.xlane.xlu0 %344
      %v346 = vlaneseq
      %v347 = vshrl.u32 %v346, 7
      %v348 = vsub.s32 1, %v347
      %v349 = vrot.slane %v215, %v348
      %v350 = vsub.f32 %v213, %v349
      %v351 = vsub.f32 %v214, %v349
      %v352 = vand.u32 2147483647, %v350
      %v353 = vand.u32 2147483647, %v351
      %v354 = vsel %vm275, %v352, 0.0
      %355 = vadd.xlane.f32.xlu0 %v354
      %v356 = vpop.xlane.xlu0 %355
      %v357 = vsel %vm275, %v353, 0.0
      %358 = vadd.xlane.f32.xlu0 %v357
      %v359 = vpop.xlane.xlu0 %358
      %v360 = vmul.f32 %v356, 5.0
      %v361 = vmul.f32 %v359, 5.0
      %v362 = vsub.f32 %v360, %v342
      %v363 = vsub.f32 %v361, %v345
      %v364 = vsel %vm308, 1e+30, %v362
      %v365 = vsel %vm309, 1e+30, %v363
      %v366 = vmin.f32 %v364, %v365
      %v367 = vrot.slane %v366, 4
      %v368 = vmin.f32 %v366, %v367
      %v369 = vrot.slane %v368, 2
      %v370 = vmin.f32 %v368, %v369
      %v371 = vrot.slane %v370, 1
      %v372 = vmin.f32 %v370, %v371
      %s373 = vtos %v372
      %v374 = vstv %s373
      %vm375 = vcmp.le.f32.partialorder %v364, %v374
      %vm376 = vcmp.le.f32.partialorder %v365, %v374
      %v377 = vsel %vm375, %v250, 16.0
      %v378 = vsel %vm376, %v251, 16.0
      %v379 = vmin.f32 %v377, %v378
      %v380 = vrot.slane %v379, 4
      %v381 = vmin.f32 %v379, %v380
      %v382 = vrot.slane %v381, 2
      %v383 = vmin.f32 %v381, %v382
      %v384 = vrot.slane %v383, 1
      %v385 = vmin.f32 %v383, %v384
      %s386 = vtos %v385
      %v387 = vstv %s386
      %vm388 = vcmp.eq.f32.partialorder %v250, %v387
      %vm389 = vcmp.eq.f32.partialorder %v251, %v387
      %vm390 = vmor %vm308, %vm388
      %vm391 = vmor %vm309, %vm389
      %v392 = vsel %vm337, 1, 0
      %v393 = vcvt.s32.f32 %v392
      %v394 = vsel %vm388, 1, 0
      %v395 = vsel %vm389, 1, 0
      %vm396 = vcmp.eq.s32.totalorder %v394, 1
      %vm397 = vcmp.eq.s32.totalorder %v395, 1
      %v398 = vsel %vm396, %v393, %v316
      %v399 = vsel %vm397, %v393, %v317
      %v400 = vsel %vm388, %v356, 0.0
      %v401 = vsel %vm389, %v359, 0.0
      %v402 = vsel %vm320, %v400, 0.0
      %v403 = vsel %vm320, %v401, 0.0
      %v404 = vadd.f32 %v402, %v403
      %405 = vadd.xlane.f32.xlu0 %v404
      %v406 = vpop.xlane.xlu0 %405
      %v407 = vrot.slane %v406, 4
      %v408 = vadd.f32 %v406, %v407
      %v409 = vrot.slane %v408, 2
      %v410 = vadd.f32 %v408, %v409
      %v411 = vrot.slane %v410, 1
      %v412 = vadd.f32 %v410, %v411
      %s413 = vtos %v412
      %s414 = sadd.f32 %s333, %s413
      %s415 = sadd.s32 %s255, 2
      %s416 = sld [smem:[#allocation3 + %s415]]
      %v417 = vstv %s416
      %vm418 = vcmp.eq.s32.totalorder %v246, %v417
      %v419 = vsel %vm418, %v237, 0.0
      %v420 = vsel %vm418, %v238, 0.0
      %v421 = vsel %vm216, %v419, 0.0
      %422 = vadd.xlane.f32.xlu0 %v421
      %v423 = vpop.xlane.xlu0 %422
      %v424 = vsel %vm216, %v420, 0.0
      %425 = vadd.xlane.f32.xlu0 %v424
      %v426 = vpop.xlane.xlu0 %425
      %v427 = vlaneseq
      %v428 = vshrl.u32 %v427, 7
      %v429 = vsub.s32 2, %v428
      %v430 = vrot.slane %v215, %v429
      %v431 = vsub.f32 %v213, %v430
      %v432 = vsub.f32 %v214, %v430
      %v433 = vand.u32 2147483647, %v431
      %v434 = vand.u32 2147483647, %v432
      %v435 = vsel %vm275, %v433, 0.0
      %436 = vadd.xlane.f32.xlu0 %v435
      %v437 = vpop.xlane.xlu0 %436
      %v438 = vsel %vm275, %v434, 0.0
      %439 = vadd.xlane.f32.xlu0 %v438
      %v440 = vpop.xlane.xlu0 %439
      %v441 = vmul.f32 %v437, 5.0
      %v442 = vmul.f32 %v440, 5.0
      %v443 = vsub.f32 %v441, %v423
      %v444 = vsub.f32 %v442, %v426
      %v445 = vsel %vm390, 1e+30, %v443
      %v446 = vsel %vm391, 1e+30, %v444
      %v447 = vmin.f32 %v445, %v446
      %v448 = vrot.slane %v447, 4
      %v449 = vmin.f32 %v447, %v448
      %v450 = vrot.slane %v449, 2
      %v451 = vmin.f32 %v449, %v450
      %v452 = vrot.slane %v451, 1
      %v453 = vmin.f32 %v451, %v452
      %s454 = vtos %v453
      %v455 = vstv %s454
      %vm456 = vcmp.le.f32.partialorder %v445, %v455
      %vm457 = vcmp.le.f32.partialorder %v446, %v455
      %v458 = vsel %vm456, %v250, 16.0
      %v459 = vsel %vm457, %v251, 16.0
      %v460 = vmin.f32 %v458, %v459
      %v461 = vrot.slane %v460, 4
      %v462 = vmin.f32 %v460, %v461
      %v463 = vrot.slane %v462, 2
      %v464 = vmin.f32 %v462, %v463
      %v465 = vrot.slane %v464, 1
      %v466 = vmin.f32 %v464, %v465
      %s467 = vtos %v466
      %v468 = vstv %s467
      %vm469 = vcmp.eq.f32.partialorder %v250, %v468
      %vm470 = vcmp.eq.f32.partialorder %v251, %v468
      %vm471 = vmor %vm390, %vm469
      %vm472 = vmor %vm391, %vm470
      %v473 = vsel %vm418, 1, 0
      %v474 = vcvt.s32.f32 %v473
      %v475 = vsel %vm469, 1, 0
      %v476 = vsel %vm470, 1, 0
      %vm477 = vcmp.eq.s32.totalorder %v475, 1
      %vm478 = vcmp.eq.s32.totalorder %v476, 1
      %v479 = vsel %vm477, %v474, %v398
      %v480 = vsel %vm478, %v474, %v399
      %v481 = vsel %vm469, %v437, 0.0
      %v482 = vsel %vm470, %v440, 0.0
      %v483 = vsel %vm320, %v481, 0.0
      %v484 = vsel %vm320, %v482, 0.0
      %v485 = vadd.f32 %v483, %v484
      %486 = vadd.xlane.f32.xlu0 %v485
      %v487 = vpop.xlane.xlu0 %486
      %v488 = vrot.slane %v487, 4
      %v489 = vadd.f32 %v487, %v488
      %v490 = vrot.slane %v489, 2
      %v491 = vadd.f32 %v489, %v490
      %v492 = vrot.slane %v491, 1
      %v493 = vadd.f32 %v491, %v492
      %s494 = vtos %v493
      %s495 = sadd.f32 %s414, %s494
      %s496 = sadd.s32 %s255, 3
      %s497 = sld [smem:[#allocation3 + %s496]]
      %v498 = vstv %s497
      %vm499 = vcmp.eq.s32.totalorder %v246, %v498
      %v500 = vsel %vm499, %v237, 0.0
      %v501 = vsel %vm499, %v238, 0.0
      %v502 = vsel %vm216, %v500, 0.0
      %503 = vadd.xlane.f32.xlu0 %v502
      %v504 = vpop.xlane.xlu0 %503
      %v505 = vsel %vm216, %v501, 0.0
      %506 = vadd.xlane.f32.xlu0 %v505
      %v507 = vpop.xlane.xlu0 %506
      %v508 = vlaneseq
      %v509 = vshrl.u32 %v508, 7
      %v510 = vsub.s32 3, %v509
      %v511 = vrot.slane %v215, %v510
      %v512 = vsub.f32 %v213, %v511
      %v513 = vsub.f32 %v214, %v511
      %v514 = vand.u32 2147483647, %v512
      %v515 = vand.u32 2147483647, %v513
      %v516 = vsel %vm275, %v514, 0.0
      %517 = vadd.xlane.f32.xlu0 %v516
      %v518 = vpop.xlane.xlu0 %517
      %v519 = vsel %vm275, %v515, 0.0
      %520 = vadd.xlane.f32.xlu0 %v519
      %v521 = vpop.xlane.xlu0 %520
      %v522 = vmul.f32 %v518, 5.0
      %v523 = vmul.f32 %v521, 5.0
      %v524 = vsub.f32 %v522, %v504
      %v525 = vsub.f32 %v523, %v507
      %v526 = vsel %vm471, 1e+30, %v524
      %v527 = vsel %vm472, 1e+30, %v525
      %v528 = vmin.f32 %v526, %v527
      %v529 = vrot.slane %v528, 4
      %v530 = vmin.f32 %v528, %v529
      %v531 = vrot.slane %v530, 2
      %v532 = vmin.f32 %v530, %v531
      %v533 = vrot.slane %v532, 1
      %v534 = vmin.f32 %v532, %v533
      %s535 = vtos %v534
      %v536 = vstv %s535
      %vm537 = vcmp.le.f32.partialorder %v526, %v536
      %vm538 = vcmp.le.f32.partialorder %v527, %v536
      %v539 = vsel %vm537, %v250, 16.0
      %v540 = vsel %vm538, %v251, 16.0
      %v541 = vmin.f32 %v539, %v540
      %v542 = vrot.slane %v541, 4
      %v543 = vmin.f32 %v541, %v542
      %v544 = vrot.slane %v543, 2
      %v545 = vmin.f32 %v543, %v544
      %v546 = vrot.slane %v545, 1
      %v547 = vmin.f32 %v545, %v546
      %s548 = vtos %v547
      %v549 = vstv %s548
      %vm550 = vcmp.eq.f32.partialorder %v250, %v549
      %vm551 = vcmp.eq.f32.partialorder %v251, %v549
      %v552 = vsel %vm499, 1, 0
      %v553 = vcvt.s32.f32 %v552
      %v554 = vsel %vm550, 1, 0
      %v555 = vsel %vm551, 1, 0
      %vm556 = vcmp.eq.s32.totalorder %v554, 1
      %vm557 = vcmp.eq.s32.totalorder %v555, 1
      %v558 = vsel %vm556, %v553, %v479
      %v559 = vsel %vm557, %v553, %v480
      %v560 = vsel %vm550, %v518, 0.0
      %v561 = vsel %vm551, %v521, 0.0
      %v562 = vsel %vm320, %v560, 0.0
      %v563 = vsel %vm320, %v561, 0.0
      %v564 = vadd.f32 %v562, %v563
      %565 = vadd.xlane.f32.xlu0 %v564
      %v566 = vpop.xlane.xlu0 %565
      %v567 = vrot.slane %v566, 4
      %v568 = vadd.f32 %v566, %v567
      %v569 = vrot.slane %v568, 2
      %v570 = vadd.f32 %v568, %v569
      %v571 = vrot.slane %v570, 1
      %v572 = vadd.f32 %v570, %v571
      %s573 = vtos %v572
      %s574 = sadd.f32 %s495, %s573
      %v575 = vsub.f32 1.0, %v558
      %v576 = vsub.f32 1.0, %v559
      %v577 = vmul.f32 %v558, %v211
      %v578 = vmul.f32 %v559, %v212
      %v579 = vsel %vm216, %v577, 0.0
      %580 = vadd.xlane.f32.xlu0 %v579
      %v581 = vpop.xlane.xlu0 %580
      %v582 = vsel %vm216, %v578, 0.0
      %583 = vadd.xlane.f32.xlu0 %v582
      %v584 = vpop.xlane.xlu0 %583
      %v585 = vsub.f32 %v243, %v581
      %v586 = vsub.f32 %v244, %v584
      %v587 = vmul.f32 %v575, 0.9
      %v588 = vmul.f32 %v576, 0.9
      %v589 = vadd.f32 %v587, 0.1
      %v590 = vadd.f32 %v588, 0.1
      %v591 = vmul.f32 %v589, %v585
      %v592 = vmul.f32 %v590, %v586
      %595 = vrot.lane.b32.xlu0 %v591, 121
      %v596 = vpop.permute.xlu0 %595
      %597 = vrot.lane.b32.xlu0 %v592, 121
      %v598 = vpop.permute.xlu0 %597
      %v601 = vsel %vm320, %v596, 0.0
      %v602 = vsel %vm320, %v598, 0.0
      %v603 = vadd.f32 %v601, %v602
      %604 = vadd.xlane.f32.xlu0 %v603
      %v605 = vpop.xlane.xlu0 %604
      %v606 = vrot.slane %v605, 4
      %v607 = vadd.f32 %v605, %v606
      %v608 = vrot.slane %v607, 2
      %v609 = vadd.f32 %v607, %v608
      %v610 = vrot.slane %v609, 1
      %v611 = vadd.f32 %v609, %v610
      %s612 = vtos %v611
      %615 = vrot.lane.b32.xlu0 %v589, 121
      %v616 = vpop.permute.xlu0 %615
      %617 = vrot.lane.b32.xlu0 %v590, 121
      %v618 = vpop.permute.xlu0 %617
      %v621 = vsel %vm320, %v616, 0.0
      %v622 = vsel %vm320, %v618, 0.0
      %v623 = vadd.f32 %v621, %v622
      %624 = vadd.xlane.f32.xlu0 %v623
      %v625 = vpop.xlane.xlu0 %624
      %v626 = vrot.slane %v625, 4
      %v627 = vadd.f32 %v625, %v626
      %v628 = vrot.slane %v627, 2
      %v629 = vadd.f32 %v627, %v628
      %v630 = vrot.slane %v629, 1
      %v631 = vadd.f32 %v629, %v630
      %s632 = vtos %v631
      %vm633 = vcmp.ge.f32.partialorder %v211, %v219
      %vm634 = vcmp.ge.f32.partialorder %v212, %v222
      %v635 = vsel %vm633, %v246, 8
      %v636 = vsel %vm634, %v246, 8
      %v637 = vsel %vm216, %v635, 2147483647
      %v638 = vand.u32 %v637, 65535
      %v639 = vshra.s32 %v637, 16
      %v640 = vcvt.s32.f32 %v638
      %v641 = vcvt.s32.f32 %v639
      %642 = vmin.xlane.f32.xlu0 %v641
      %v643 = vpop.xlane.xlu0 %642
      %vm644 = vcmp.eq.f32.partialorder %v641, %v643
      %v645 = vsel %vm644, %v640, inf
      %646 = vmin.xlane.f32.xlu0 %v645
      %v647 = vpop.xlane.xlu0 %646
      %v648 = vcvt.f32.s32 %v647
      %v649 = vcvt.f32.s32 %v643
      %v650 = vshll.u32 %v649, 16
      %v651 = vadd.s32 %v650, %v648
      %v652 = vsel %vm216, %v636, 2147483647
      %v653 = vand.u32 %v652, 65535
      %v654 = vshra.s32 %v652, 16
      %v655 = vcvt.s32.f32 %v653
      %v656 = vcvt.s32.f32 %v654
      %657 = vmin.xlane.f32.xlu0 %v656
      %v658 = vpop.xlane.xlu0 %657
      %vm659 = vcmp.eq.f32.partialorder %v656, %v658
      %v660 = vsel %vm659, %v655, inf
      %661 = vmin.xlane.f32.xlu0 %v660
      %v662 = vpop.xlane.xlu0 %661
      %v663 = vcvt.f32.s32 %v662
      %v664 = vcvt.f32.s32 %v658
      %v665 = vshll.u32 %v664, 16
      %v666 = vadd.s32 %v665, %v663
      %vm667 = vcmp.ne.s32.totalorder %v651, 7
      %vm668 = vcmp.ne.s32.totalorder %v666, 7
      %v669 = vsel %vm667, 1, 0
      %v670 = vsel %vm668, 1, 0
      %v671 = vcvt.s32.f32 %v669
      %v672 = vcvt.s32.f32 %v670
      %v673 = vsel %vm320, %v671, 0.0
      %v674 = vsel %vm320, %v672, 0.0
      %v675 = vadd.f32 %v673, %v674
      %676 = vadd.xlane.f32.xlu0 %v675
      %v677 = vpop.xlane.xlu0 %676
      %v678 = vrot.slane %v677, 4
      %v679 = vadd.f32 %v677, %v678
      %v680 = vrot.slane %v679, 2
      %v681 = vadd.f32 %v679, %v680
      %v682 = vrot.slane %v681, 1
      %v683 = vadd.f32 %v681, %v682
      %s684 = vtos %v683
      %s685 = ssub.f32 %s684, 4.0
      %s686 = sand.u32 2147483647, %s685
      %vm687 = vcmp.eq.s32.totalorder %v246, 0
      %v688 = vstv %s612
      %v689 = vsel %vm687, %v688, 0.0
      %vm690 = vcmp.eq.s32.totalorder %v246, 1
      %v691 = vstv %s632
      %v692 = vsel %vm690, %v691, 0.0
      %v693 = vadd.f32 %v689, %v692
      %vm694 = vcmp.eq.s32.totalorder %v246, 2
      %v695 = vstv %s686
      %v696 = vsel %vm694, %v695, 0.0
      %v697 = vadd.f32 %v693, %v696
      %vm698 = vcmp.eq.s32.totalorder %v246, 3
      %v699 = vstv %s574
      %v700 = vsel %vm698, %v699, 0.0
      %v701 = vadd.f32 %v697, %v700
      %702 = vst [vmem:[%s210] sm:$0x1] %v701
      %p703 = scmp.lt.s32.totalorder %s21, 1
      %s704 = scalar_select %p703, %s21, 1
      %s705 = scalar_lea.vmem %s4, %s704
      // Predicated region
      $region33: #{set_criterion_forward.1} parent=31 // pred_check
        %p706 = pneg %p117
      $region34: #{set_criterion_forward.1} parent=31 // pred_check_branch
        %708 = sbr.rel (%p706) target = $region36
      $region35: #{set_criterion_forward.1} parent=31 // pred_region
        _
      $region36: #{set_criterion_forward.1} parent=31 // pred_fallthru
        _
    $region32: #{set_criterion_forward.1} parent=5 // pred_fallthru
      _
    %p709 = scmp.le.s32.totalorder 2, %s16
    // Predicated region
    $region37: #{set_criterion_forward.1} parent=5 // pred_check
      %p710 = pneg %p709
    $region38: #{set_criterion_forward.1} parent=5 // pred_check_branch
      %712 = sbr.rel (%p710) target = $region40
    $region39: #{set_criterion_forward.1} parent=5 // pred_region
      %s713 = ssub.s32 %s16, 2
      // Predicated region
      $region41: #{set_criterion_forward.1} parent=39 // pred_check
        %p714 = pneg %p123
      $region42: #{set_criterion_forward.1} parent=39 // pred_check_branch
        %716 = sbr.rel (%p714) target = $region44
      $region43: #{set_criterion_forward.1} parent=39 // pred_region
        %p717 = scmp.lt.s32.totalorder %s22, 1
        %s718 = scalar_select %p717, %s22, 1
        %s719 = scalar_lea.vmem %s4, %s718
      $region44: #{set_criterion_forward.1} parent=39 // pred_fallthru
        _
    $region40: #{set_criterion_forward.1} parent=5 // pred_fallthru
      _
  $region6: #{set_criterion_forward.1} parent=0 // loop_footer
    %s20 = sadd.s32 1, %s16
  $region7: #{set_criterion_forward.1} parent=0 // loop_footer_branch
    %15 = sbr.rel target = $region3
  $region8: #{set_criterion_forward.1} parent=0 // loop_exit
    _

</llo_original>
